<compile_context>
chip_gen: v5e
topology: v5e:2x2
jax: 0.10.0
libtpu: 0.0.40
codegen_flags: <defaults>
</compile_context>

<pallas_src>
import functools

import jax
import jax.numpy as jnp
from jax.experimental import pallas as pl
from jax.experimental.pallas import tpu as pltpu


def _round_up(x: int, m: int) -> int:
    return ((x + m - 1) // m) * m


def _linear_kernel(x_ref, w_ref, b_ref, o_ref, acc_ref):
    """One (tm, tn) output tile; k is the contraction grid axis (last, 'arbitrary')."""
    k = pl.program_id(2)

    @pl.when(k == 0)
    def _():
        acc_ref[...] = jnp.zeros_like(acc_ref)

    # MXU matmul, f32 accumulation.  W is already (tk, tn): no transpose needed.
    acc_ref[...] += jnp.dot(
        x_ref[...], w_ref[...], preferred_element_type=jnp.float32
    )

    @pl.when(k == pl.num_programs(2) - 1)
    def _():
        # Bias add only in the finalize branch (bias tile is (1, tn), broadcast
        # happens once here, outside the hot reduction loop).
        o_ref[...] = (acc_ref[...] + b_ref[...]).astype(o_ref.dtype)


@functools.partial(jax.jit, static_argnames=("tm", "tn", "tk"))
def linear_regression_forward(x, w, b, *, tm=256, tn=256, tk=512):
    """y = x @ w.T + b, matching torch.nn.Linear semantics.

    x: (batch, in_dims) float32
    w: (out_dims, in_dims) float32   (PyTorch layout)
    b: (out_dims,) float32
    returns: (batch, out_dims) float32

    Default tiles (tm=256, tn=256, tk=512, f32) give a ~2 MiB double-buffered
    working set — safe under the scoped-VMEM defaults of v5e/v6e/v7x while still
    amortizing the per-grid-step overhead.
    """
    M, K = x.shape
    N = w.shape[0]

    # Pre-transpose W in HBM (layout plumbing, not compute hoisting): (K, N).
    w_t = w.T

    # Clamp tiles to the (rounded-up) problem size, then pad to tile multiples.
    tm = min(tm, _round_up(M, 8))
    tn = min(tn, _round_up(N, 128))
    tk = min(tk, _round_up(K, 128))

    Mp = _round_up(M, tm)
    Np = _round_up(N, tn)
    Kp = _round_up(K, tk)

    x_p = jnp.pad(x, ((0, Mp - M), (0, Kp - K)))
    w_p = jnp.pad(w_t, ((0, Kp - K), (0, Np - N)))
    b_p = jnp.pad(b.reshape(1, N), ((0, 0), (0, Np - N)))

    grid = (Mp // tm, Np // tn, Kp // tk)

    y_p = pl.pallas_call(
        _linear_kernel,
        out_shape=jax.ShapeDtypeStruct((Mp, Np), x.dtype),
        grid_spec=pltpu.PrefetchScalarGridSpec(
            num_scalar_prefetch=0,
            grid=grid,
            in_specs=[
                pl.BlockSpec((tm, tk), lambda i, j, k: (i, k)),   # X tile
                pl.BlockSpec((tk, tn), lambda i, j, k: (k, j)),   # W^T tile
                pl.BlockSpec((1, tn), lambda i, j, k: (0, j)),    # bias tile (j only)
            ],
            out_specs=pl.BlockSpec((tm, tn), lambda i, j, k: (i, j)),
            scratch_shapes=[pltpu.VMEM((tm, tn), jnp.float32)],
        ),
        compiler_params=pltpu.CompilerParams(
            dimension_semantics=("parallel", "parallel", "arbitrary"),
        ),
    )(x_p, w_p, b_p)

    return y_p[:M, :N]


if __name__ == "__main__":
    # Small shapes consistent with the module: batch=8, in_dims=32, out_dims=1.
    batch, in_dims, out_dims = 8, 32, 1

    key = jax.random.PRNGKey(0)
    kx, kw, kb = jax.random.split(key, 3)

    x = jax.random.normal(kx, (batch, in_dims), dtype=jnp.float32)
    # Deterministic parameter init (mimics nn.Linear's uniform(-1/sqrt(in), 1/sqrt(in))).
    bound = 1.0 / jnp.sqrt(jnp.float32(in_dims))
    w = jax.random.uniform(kw, (out_dims, in_dims), minval=-bound, maxval=bound,
                           dtype=jnp.float32)
    b = jax.random.uniform(kb, (out_dims,), minval=-bound, maxval=bound,
                           dtype=jnp.float32)

    y = linear_regression_forward(x, w, b)
    jax.block_until_ready(y)

    # Reference check against plain JAX.
    y_ref = x @ w.T + b[None, :]
    assert y.shape == (batch, out_dims), y.shape
    assert jnp.allclose(y, y_ref, atol=1e-5, rtol=1e-5)

    print("KERNEL_OK")
</pallas_src>

<mosaic_0001>
module attributes {stable_mosaic.version = 11 : i64} {
  func.func @_linear_kernel(%arg0: i32, %arg1: i32, %arg2: i32, %arg3: memref<8x128xf32, #tpu.memory_space<vmem>>, %arg4: memref<128x128xf32, #tpu.memory_space<vmem>>, %arg5: memref<1x128xf32, #tpu.memory_space<vmem>>, %arg6: memref<8x128xf32, #tpu.memory_space<vmem>>, %arg7: memref<8x128xf32, #tpu.memory_space<vmem>>) attributes {dimension_semantics = [#tpu.dimension_semantics<parallel>, #tpu.dimension_semantics<parallel>, #tpu.dimension_semantics<arbitrary>], iteration_bounds = array<i64: 1, 1, 1>, scalar_prefetch = 0 : i64, scratch_operands = 1 : i64, tpu.core_type = #tpu.core_type<tc>, window_params = [{transform_indices = @transform_0, window_bounds = array<i64: 8, 128>}, {transform_indices = @transform_1, window_bounds = array<i64: 128, 128>}, {transform_indices = @transform_2, window_bounds = array<i64: 1, 128>}, {transform_indices = @transform_3, window_bounds = array<i64: 8, 128>}]} {
    %c0_i32 = arith.constant 0 : i32
    %0 = arith.cmpi eq, %arg2, %c0_i32 : i32
    %1 = arith.extui %0 : i1 to i32
    %c0_i32_0 = arith.constant 0 : i32
    %2 = arith.cmpi ne, %1, %c0_i32_0 : i32
    scf.if %2 {
      %cst_10 = arith.constant 0.000000e+00 : f32
      %12 = vector.broadcast %cst_10 : f32 to vector<8x128xf32>
      %c0_11 = arith.constant 0 : index
      %c0_12 = arith.constant 0 : index
      %13 = vector.load %arg7[%c0_11, %c0_12] : memref<8x128xf32, #tpu.memory_space<vmem>>, vector<8x128xf32>
      tpu.vector_store %arg7[%c0_11, %c0_12], %12 {strides = array<i32>} : memref<8x128xf32, #tpu.memory_space<vmem>>, vector<8x128xf32>,
    } else {
    }
    %c0 = arith.constant 0 : index
    %c0_1 = arith.constant 0 : index
    %3 = vector.load %arg7[%c0, %c0_1] : memref<8x128xf32, #tpu.memory_space<vmem>>, vector<8x128xf32>
    %c0_2 = arith.constant 0 : index
    %c0_3 = arith.constant 0 : index
    %4 = vector.load %arg3[%c0_2, %c0_3] : memref<8x128xf32, #tpu.memory_space<vmem>>, vector<8x128xf32>
    %c0_4 = arith.constant 0 : index
    %c0_5 = arith.constant 0 : index
    %5 = vector.load %arg4[%c0_4, %c0_5] : memref<128x128xf32, #tpu.memory_space<vmem>>, vector<128x128xf32>
    %cst = arith.constant dense<0.000000e+00> : vector<8x128xf32>
    %6 = tpu.matmul %4, %5, %cst {dimension_numbers = #tpu.dot_dimension_numbers<[1], [0], [0], [1], [0, 0, 1, 1], [], []>} : vector<8x128xf32>, vector<128x128xf32>, vector<8x128xf32> -> vector<8x128xf32>
    %7 = arith.addf %3, %6 : vector<8x128xf32>
    %c0_6 = arith.constant 0 : index
    %c0_7 = arith.constant 0 : index
    %8 = vector.load %arg7[%c0_6, %c0_7] : memref<8x128xf32, #tpu.memory_space<vmem>>, vector<8x128xf32>
    tpu.vector_store %arg7[%c0_6, %c0_7], %7 {strides = array<i32>} : memref<8x128xf32, #tpu.memory_space<vmem>>, vector<8x128xf32>,
    %c0_i32_8 = arith.constant 0 : i32
    %9 = arith.cmpi eq, %arg2, %c0_i32_8 : i32
    %10 = arith.extui %9 : i1 to i32
    %c0_i32_9 = arith.constant 0 : i32
    %11 = arith.cmpi ne, %10, %c0_i32_9 : i32
    scf.if %11 {
      %c0_10 = arith.constant 0 : index
      %c0_11 = arith.constant 0 : index
      %12 = vector.load %arg7[%c0_10, %c0_11] : memref<8x128xf32, #tpu.memory_space<vmem>>, vector<8x128xf32>
      %c0_12 = arith.constant 0 : index
      %c0_13 = arith.constant 0 : index
      %13 = vector.load %arg5[%c0_12, %c0_13] : memref<1x128xf32, #tpu.memory_space<vmem>>, vector<1x128xf32>
      %14 = vector.broadcast %13 : vector<1x128xf32> to vector<8x128xf32>
      %15 = arith.addf %12, %14 : vector<8x128xf32>
      %c0_14 = arith.constant 0 : index
      %c0_15 = arith.constant 0 : index
      %16 = vector.load %arg6[%c0_14, %c0_15] : memref<8x128xf32, #tpu.memory_space<vmem>>, vector<8x128xf32>
      tpu.vector_store %arg6[%c0_14, %c0_15], %15 {strides = array<i32>} : memref<8x128xf32, #tpu.memory_space<vmem>>, vector<8x128xf32>,
    } else {
    }
    return
  }
  func.func @transform_0(%arg0: i32, %arg1: i32, %arg2: i32) -> (i32, i32) {
    %c0_i32 = arith.constant 0 : i32
    return %arg0, %arg2 : i32, i32
  }
  func.func @transform_1(%arg0: i32, %arg1: i32, %arg2: i32) -> (i32, i32) {
    %c0_i32 = arith.constant 0 : i32
    return %arg2, %arg1 : i32, i32
  }
  func.func @transform_2(%arg0: i32, %arg1: i32, %arg2: i32) -> (i32, i32) {
    %c0_i32 = arith.constant 0 : i32
    %c0_i32_0 = arith.constant 0 : i32
    return %c0_i32, %arg1 : i32, i32
  }
  func.func @transform_3(%arg0: i32, %arg1: i32, %arg2: i32) -> (i32, i32) {
    %c0_i32 = arith.constant 0 : i32
    return %arg0, %arg1 : i32, i32
  }
}

</mosaic_0001>

<llo_original>
// kernel: linear_regression_forward.1
$region0: #{linear_regression_forward.1}
  #allocation0 [shape = 'u32[]', space=smem, size = 0x4, offset = 0x4, fixed_abs, tag = 'smem constant byte address 0x4 - core index']
  #allocation1 [shape = 'u32[72,128]{1,0:T(1,128)}', space=vmem, size = 0x9000, scoped, tag = 'internal scratch']
  #allocation2 [shape = 'f32[8,128]{1,0:T(8,128)}', space=vmem, size = 0x1000, scoped, tag = 'scratch operand']
  %s0 = inlined_call_operand.vmem [shape: f32[8,128], index: 0, kind: input, shape index: {}]
  %s1 = inlined_call_operand.vmem [shape: f32[128,128], index: 1, kind: input, shape index: {}]
  %s2 = inlined_call_operand.vmem [shape: f32[1,128], index: 2, kind: input, shape index: {}]
  %s3 = inlined_call_operand.vmem [shape: f32[8,128], index: 3, kind: output, shape index: {}]
  %s4 = sld [smem:[#allocation0]]
  $region30: #{linear_regression_forward.1} parent=0
    _
  %s6 = ssub.s32 1, %s4
  %s7 = scalar_select 0, %s6, %s4
  // Predicated region
  $region2: #{linear_regression_forward.1} parent=0 // pred_check
    _
  $region3: #{linear_regression_forward.1} parent=0 // pred_check_branch
    %9 = sbr.rel (0) target = $region5
  $region4: #{linear_regression_forward.1} parent=0 // pred_region
    _
  $region5: #{linear_regression_forward.1} parent=0 // pred_fallthru
    _
  // Predicated region
  $region6: #{linear_regression_forward.1} parent=0 // pred_check
    _
  $region7: #{linear_regression_forward.1} parent=0 // pred_check_branch
    %11 = sbr.rel (0) target = $region9
  $region8: #{linear_regression_forward.1} parent=0 // pred_region
    _
  $region9: #{linear_regression_forward.1} parent=0 // pred_fallthru
    _
  // Predicated region
  $region10: #{linear_regression_forward.1} parent=0 // pred_check
    _
  $region11: #{linear_regression_forward.1} parent=0 // pred_check_branch
    %13 = sbr.rel (0) target = $region13
  $region12: #{linear_regression_forward.1} parent=0 // pred_region
    _
  $region13: #{linear_regression_forward.1} parent=0 // pred_fallthru
    _
  %p14 = scmp.eq.s32.totalorder 0, 0
  // Predicated region
  $region14: #{linear_regression_forward.1} parent=0 // pred_check
    %p15 = pneg %p14
  $region15: #{linear_regression_forward.1} parent=0 // pred_check_branch
    %17 = sbr.rel (%p15) target = $region17
  $region16: #{linear_regression_forward.1} parent=0 // pred_region
    %18 = vst [vmem:[#allocation2] sm:$0xff] 0.0
  $region17: #{linear_regression_forward.1} parent=0 // pred_fallthru
    _
  %v19 = vld [vmem:[#allocation2] sm:$0xff]
  %v20 = vld [vmem:[%s0] sm:$0xff]
  %v21 = vld [vmem:[%s1] sm:$0xff]
  %v22 = vld [vmem:[%s1 + $0x8] sm:$0xff]
  %v23 = vld [vmem:[%s1 + $0x10] sm:$0xff]
  %v24 = vld [vmem:[%s1 + $0x18] sm:$0xff]
  %v25 = vld [vmem:[%s1 + $0x20] sm:$0xff]
  %v26 = vld [vmem:[%s1 + $0x28] sm:$0xff]
  %v27 = vld [vmem:[%s1 + $0x30] sm:$0xff]
  %v28 = vld [vmem:[%s1 + $0x38] sm:$0xff]
  %v29 = vld [vmem:[%s1 + $0x40] sm:$0xff]
  %v30 = vld [vmem:[%s1 + $0x48] sm:$0xff]
  %v31 = vld [vmem:[%s1 + $0x50] sm:$0xff]
  %v32 = vld [vmem:[%s1 + $0x58] sm:$0xff]
  %v33 = vld [vmem:[%s1 + $0x60] sm:$0xff]
  %v34 = vld [vmem:[%s1 + $0x68] sm:$0xff]
  %v35 = vld [vmem:[%s1 + $0x70] sm:$0xff]
  %v36 = vld [vmem:[%s1 + $0x78] sm:$0xff]
  %37 = vmatpush.msra.mxu0 %v36
  %38 = vmatpush.msra.mxu0 %v35
  %39 = vmatpush.msra.mxu0 %v34
  %40 = vmatpush.msra.mxu0 %v33
  %41 = vmatpush.msra.mxu0 %v32
  %42 = vmatpush.msra.mxu0 %v31
  %43 = vmatpush.msra.mxu0 %v30
  %44 = vmatpush.msra.mxu0 %v29
  %45 = vmatpush.msra.mxu0 %v28
  %46 = vmatpush.msra.mxu0 %v27
  %47 = vmatpush.msra.mxu0 %v26
  %48 = vmatpush.msra.mxu0 %v25
  %49 = vmatpush.msra.mxu0 %v24
  %50 = vmatpush.msra.mxu0 %v23
  %51 = vmatpush.msra.mxu0 %v22
  %52 = vmatpush.msra.mxu0 %v21
  %53 = vmatmul.f32.gmra.mxu0 %v20
  %v54 = vpop.f32.mrf.mxu0
  %v55 = vadd.f32 0.0, %v54
  %56 = vdwg.mxu0
  %v57 = vadd.f32 %v19, %v55
  %58 = vst [vmem:[#allocation2] sm:$0xff] %v57
  // Predicated region
  $region18: #{linear_regression_forward.1} parent=0 // pred_check
    %p59 = pneg %p14
  $region19: #{linear_regression_forward.1} parent=0 // pred_check_branch
    %61 = sbr.rel (%p59) target = $region21
  $region20: #{linear_regression_forward.1} parent=0 // pred_region
    %v62 = vld [vmem:[#allocation2] sm:$0xff]
    %v63 = vld [vmem:[%s2] sm:$0x1]
    %v65 = vperm.slane %v63, 0
    %v67 = vadd.f32 %v62, %v65
    %68 = vst [vmem:[%s3] sm:$0xff] %v67
  $region21: #{linear_regression_forward.1} parent=0 // pred_fallthru
    _
  // Predicated region
  $region22: #{linear_regression_forward.1} parent=0 // pred_check
    _
  $region23: #{linear_regression_forward.1} parent=0 // pred_check_branch
    %70 = sbr.rel (0) target = $region25
  $region24: #{linear_regression_forward.1} parent=0 // pred_region
    _
  $region25: #{linear_regression_forward.1} parent=0 // pred_fallthru
    _
  // Predicated region
  $region26: #{linear_regression_forward.1} parent=0 // pred_check
    _
  $region27: #{linear_regression_forward.1} parent=0 // pred_check_branch
    %72 = sbr.rel (0) target = $region29
  $region28: #{linear_regression_forward.1} parent=0 // pred_region
    _
  $region29: #{linear_regression_forward.1} parent=0 // pred_fallthru
    _

</llo_original>
